<compile_context>
chip_gen: v7x
topology: tpu7x:2x2x1
jax: 0.10.0
libtpu: 0.0.40
codegen_flags: <defaults>
</compile_context>

<pallas_src>
import functools

import numpy as np
import jax
import jax.numpy as jnp
from jax import lax
from jax.experimental import pallas as pl
from jax.experimental.pallas import tpu as pltpu


# ----------------------------- Pallas kernel --------------------------------
def tree_lstm_kernel(lslot_ref, rslot_ref, post2slot_ref, rootslot_ref,  # SMEM prefetch
                     iofu_x_ref, wh_ref,                                  # VMEM inputs
                     hidden_ref, final_ref,                               # VMEM outputs
                     ch_scr, lbuf, rbuf):                                 # VMEM scratch
    H = hidden_ref.shape[1]
    two_h = 2 * H
    w_pad = lbuf.shape[0]
    total_slots = iofu_x_ref.shape[0]
    num_levels = total_slots // w_pad
    num_nodes = hidden_ref.shape[0]
    num_trees = final_ref.shape[0]

    # Sentinel row (index = total_slots) == "missing child" state (zeros).
    ch_scr[pl.ds(total_slots, 1), :] = jnp.zeros((1, two_h), jnp.float32)

    # Hoist the merged recurrent weight out of the level loop.
    wh = wh_ref[...]                                   # (2H, 5H), u-cols pre-scaled x2

    def level_body(lvl, carry):
        base = pl.multiple_of(lvl * w_pad, w_pad)

        # Gather the children's [c | h] rows for every slot of this level.
        # Iterations are independent; fully unrolled so the vlds overlap.
        for w in range(w_pad):
            s = base + w
            lbuf[pl.ds(w, 1), :] = ch_scr[pl.ds(lslot_ref[s], 1), :]
            rbuf[pl.ds(w, 1), :] = ch_scr[pl.ds(rslot_ref[s], 1), :]

        lrows = lbuf[...]                              # (w_pad, 2H) = [c_l | h_l]
        rrows = rbuf[...]                              # (w_pad, 2H) = [c_r | h_r]
        c_l, h_l = lrows[:, :H], lrows[:, H:]
        c_r, h_r = rrows[:, :H], rrows[:, H:]

        # One merged recurrent dot for the whole level.
        hcat = jnp.concatenate([h_l, h_r], axis=1)     # (w_pad, 2H)
        z = iofu_x_ref[pl.ds(base, w_pad), :] + jnp.dot(
            hcat, wh, preferred_element_type=jnp.float32)           # (w_pad, 5H)

        # Single EUP sigmoid pass; u gate = tanh via 2*sigmoid(2x) - 1
        # (the factor 2 on the u pre-activation was folded into iofu_x / wh).
        s_all = jax.nn.sigmoid(z)
        i   = s_all[:, 0 * H:1 * H]
        o   = s_all[:, 1 * H:2 * H]
        f_l = s_all[:, 2 * H:3 * H]
        f_r = s_all[:, 3 * H:4 * H]
        u   = 2.0 * s_all[:, 4 * H:5 * H] - 1.0

        c = i * u + f_l * c_l + f_r * c_r
        h = o * jnp.tanh(c)
        ch_scr[pl.ds(base, w_pad), :] = jnp.concatenate([c, h], axis=1)
        return carry

    lax.fori_loop(0, num_levels, level_body, 0)

    # Epilogue: hidden in post-order (torch.cat order), root h per tree.
    for p in range(num_nodes):
        row = ch_scr[pl.ds(post2slot_ref[p], 1), :]
        hidden_ref[pl.ds(p, 1), :] = row[:, H:]
    for k in range(num_trees):
        row = ch_scr[pl.ds(rootslot_ref[k], 1), :]
        final_ref[pl.ds(k, 1), :] = row[:, H:]


# ------------------------------ wrapper --------------------------------------
@functools.partial(jax.jit, static_argnames=("w_pad",))
def root_centric_tree_lstm(slot_feat_idx, slot_valid, slot_has_left, slot_has_right,
                           lslot, rslot, post2slot, root_slot,
                           features_flat, wx_t, bx, whl_t, bhl, whr_t, bhr, *, w_pad):
    total_slots = lslot.shape[0]
    num_levels = total_slots // w_pad
    num_nodes = post2slot.shape[0]
    num_trees = root_slot.shape[0]
    h_dim = whl_t.shape[0]
    five_h = whl_t.shape[1]

    # Hoisted batched input projection at DEFAULT MXU precision (perf review);
    # one well-shaped matmul over all objects, gathered into wavefront slot order,
    # child-conditional forget-gate biases folded in, padded slots zeroed.
    proj = jnp.dot(features_flat, wx_t) + bx                      # (total_obj, 5H)
    iofu_x = jnp.take(proj, slot_feat_idx, axis=0)                # (total_slots, 5H)
    iofu_x = (slot_valid[:, None] * iofu_x
              + slot_has_left[:, None] * bhl
              + slot_has_right[:, None] * bhr)

    # Fold tanh(x) = 2*sigmoid(2x) - 1 into the parameters: scale the u-gate
    # pre-activation columns by 2 here so the kernel only needs one sigmoid pass.
    u_scale = jnp.where(jnp.arange(five_h) >= 4 * h_dim, 2.0, 1.0)[None, :]
    iofu_x = iofu_x * u_scale
    wh = jnp.concatenate([whl_t, whr_t], axis=0) * u_scale        # (2H, 5H) merged

    grid_spec = pltpu.PrefetchScalarGridSpec(
        num_scalar_prefetch=4,          # lslot, rslot, post2slot, root_slot -> SMEM
        grid=(1,),                      # whole wavefront schedule in one grid step
        in_specs=[
            pl.BlockSpec((total_slots, five_h), lambda i, ls, rs, p2, rt: (0, 0)),
            pl.BlockSpec((2 * h_dim, five_h),   lambda i, ls, rs, p2, rt: (0, 0)),
        ],
        out_specs=[
            pl.BlockSpec((num_nodes, h_dim),    lambda i, ls, rs, p2, rt: (0, 0)),
            pl.BlockSpec((num_trees, h_dim),    lambda i, ls, rs, p2, rt: (0, 0)),
        ],
        scratch_shapes=[
            pltpu.VMEM((total_slots + 1, 2 * h_dim), jnp.float32),  # [c|h] + sentinel
            pltpu.VMEM((w_pad, 2 * h_dim), jnp.float32),            # left-child gather
            pltpu.VMEM((w_pad, 2 * h_dim), jnp.float32),            # right-child gather
        ],
    )

    cost = pl.CostEstimate(
        flops=int(num_levels * w_pad * 2 * (2 * h_dim) * five_h),
        transcendentals=int(num_levels * w_pad * (five_h + h_dim)),
        bytes_accessed=int(4 * (total_slots * five_h + 2 * h_dim * five_h
                                + num_nodes * h_dim + num_trees * h_dim)),
    )

    hidden, final = pl.pallas_call(
        tree_lstm_kernel,
        out_shape=(jax.ShapeDtypeStruct((num_nodes, h_dim), jnp.float32),
                   jax.ShapeDtypeStruct((num_trees, h_dim), jnp.float32)),
        grid_spec=grid_spec,
        compiler_params=pltpu.CompilerParams(
            dimension_semantics=("arbitrary",),     # level loop is sequential
            vmem_limit_bytes=32 * 1024 * 1024),
        cost_estimate=cost,
    )(lslot, rslot, post2slot, root_slot, iofu_x, wh)
    return final, hidden


# ------------------------------ host-side glue -------------------------------
class Tree:
    def __init__(self, index, left=None, right=None):
        self.index = index
        self.left_child = left
        self.right_child = right


def flatten_forest(forest, num_obj):
    """Post-order DFS per tree (matches BiTreeLSTM_Foreward.forward recursion /
    the torch.cat order of treelstm_io.hidden), trees concatenated in forest order.
    Missing children are marked with -1."""
    feat_flat_idx, left_pos, right_pos = [], [], []
    has_left, has_right, root_pos = [], [], []

    def visit(node, tree_idx):
        if node.left_child is not None:
            lp, hl = visit(node.left_child, tree_idx), 1.0
        else:
            lp, hl = -1, 0.0
        if node.right_child is not None:
            rp, hr = visit(node.right_child, tree_idx), 1.0
        else:
            rp, hr = -1, 0.0
        pos = len(feat_flat_idx)
        feat_flat_idx.append(tree_idx * num_obj + node.index)
        left_pos.append(lp)
        right_pos.append(rp)
        has_left.append(hl)
        has_right.append(hr)
        return pos

    for ti, tree in enumerate(forest):
        root_pos.append(visit(tree, ti))

    return (np.array(feat_flat_idx, np.int32), np.array(left_pos, np.int32),
            np.array(right_pos, np.int32), np.array(root_pos, np.int32),
            np.array(has_left, np.float32), np.array(has_right, np.float32))


def build_level_schedule(feat_flat_idx, left_pos, right_pos, root_pos,
                         has_left, has_right, sublane=8):
    """Bucket post-order nodes by tree level (leaves = 0) for wavefront execution.
    Each level is padded to a common, sublane-aligned width w_pad; padded slots and
    missing children point at a zero sentinel row (index = total_slots)."""
    n = len(feat_flat_idx)
    level = np.zeros(n, np.int32)
    for p in range(n):                      # post-order: children precede parents
        lv = 0
        if left_pos[p] >= 0:
            lv = max(lv, level[left_pos[p]] + 1)
        if right_pos[p] >= 0:
            lv = max(lv, level[right_pos[p]] + 1)
        level[p] = lv
    num_levels = int(level.max()) + 1
    counts = np.bincount(level, minlength=num_levels)
    w_pad = int(-(-int(counts.max()) // sublane) * sublane)
    total_slots = num_levels * w_pad
    sentinel = total_slots

    post2slot = np.zeros(n, np.int32)
    fill = np.zeros(num_levels, np.int32)
    for p in range(n):
        post2slot[p] = level[p] * w_pad + fill[level[p]]
        fill[level[p]] += 1

    slot_feat_idx = np.zeros(total_slots, np.int32)
    slot_valid = np.zeros(total_slots, np.float32)
    slot_has_left = np.zeros(total_slots, np.float32)
    slot_has_right = np.zeros(total_slots, np.float32)
    lslot = np.full(total_slots, sentinel, np.int32)
    rslot = np.full(total_slots, sentinel, np.int32)
    for p in range(n):
        s = post2slot[p]
        slot_feat_idx[s] = feat_flat_idx[p]
        slot_valid[s] = 1.0
        slot_has_left[s] = has_left[p]
        slot_has_right[s] = has_right[p]
        if left_pos[p] >= 0:
            lslot[s] = post2slot[left_pos[p]]
        if right_pos[p] >= 0:
            rslot[s] = post2slot[right_pos[p]]
    root_slot = post2slot[np.asarray(root_pos)].astype(np.int32)
    return (slot_feat_idx, slot_valid, slot_has_left, slot_has_right,
            lslot, rslot, post2slot, root_slot, w_pad)


def block_orthogonal(key, shape, block):
    """Deterministic block-orthogonal init (mirrors the torch block_orthogonal)."""
    rows, cols = shape
    br, bc = block
    out = np.zeros(shape, np.float32)
    for i in range(rows // br):
        for j in range(cols // bc):
            key, sub = jax.random.split(key)
            m = jax.random.normal(sub, (max(br, bc), max(br, bc)), jnp.float32)
            q, _ = jnp.linalg.qr(m)
            out[i * br:(i + 1) * br, j * bc:(j + 1) * bc] = np.asarray(q)[:br, :bc]
    return out


def reference(proj, feat_flat_idx, left_pos, right_pos, root_pos, has_l, has_r,
              WhL, bhL, WhR, bhR):
    """Numpy re-implementation of node_forward chained over the post-order.
    Takes the same (default-precision) input projection `proj` the wrapper uses so
    the comparison isolates the in-kernel recurrence."""
    n = len(feat_flat_idx)
    H = WhL.shape[1]
    cs = np.zeros((n, H), np.float32)
    hs = np.zeros((n, H), np.float32)
    sig = lambda z: 1.0 / (1.0 + np.exp(-z))
    for t in range(n):
        ioffu = proj[feat_flat_idx[t]:feat_flat_idx[t] + 1]
        if has_l[t] > 0:
            lp = left_pos[t]
            ioffu = ioffu + hs[lp:lp + 1] @ WhL.T + bhL
            c_l = cs[lp:lp + 1]
        else:
            c_l = np.zeros((1, H), np.float32)
        if has_r[t] > 0:
            rp = right_pos[t]
            ioffu = ioffu + hs[rp:rp + 1] @ WhR.T + bhR
            c_r = cs[rp:rp + 1]
        else:
            c_r = np.zeros((1, H), np.float32)
        i, o, f_l, f_r, u = np.split(ioffu, 5, axis=1)
        c = sig(i) * np.tanh(u) + sig(f_l) * c_l + sig(f_r) * c_r
        h = sig(o) * np.tanh(c)
        cs[t], hs[t] = c, h
    return hs, hs[root_pos]


if __name__ == "__main__":
    feat_dim, h_dim = 32, 32
    num_obj, num_trees = 7, 2

    key = jax.random.PRNGKey(0)
    k_feat, k_wx, k_wl, k_wr = jax.random.split(key, 4)

    # Parameters (deterministic, mirroring BiTreeLSTM_Foreward.__init__)
    Wx = block_orthogonal(k_wx, (5 * h_dim, feat_dim), (h_dim, feat_dim))   # ioffux.weight
    WhL = block_orthogonal(k_wl, (5 * h_dim, h_dim), (h_dim, h_dim))        # ioffuh_left.weight
    WhR = block_orthogonal(k_wr, (5 * h_dim, h_dim), (h_dim, h_dim))        # ioffuh_right.weight
    bx = np.zeros((1, 5 * h_dim), np.float32)                               # ioffux.bias
    bhl = np.zeros((1, 5 * h_dim), np.float32)                              # ioffuh_left.bias
    bhl[:, 2 * h_dim:4 * h_dim] = 0.5
    bhr = np.zeros((1, 5 * h_dim), np.float32)                              # ioffuh_right.bias
    bhr[:, 2 * h_dim:4 * h_dim] = 0.5

    # Inputs: per-tree feature slabs (features[idx] in the module)
    features = np.asarray(
        jax.random.normal(k_feat, (num_trees, num_obj, feat_dim), jnp.float32))
    features_flat = features.reshape(num_trees * num_obj, feat_dim)

    # A small forest: one full binary tree, one tree with single-child nodes.
    forest = [
        Tree(3, left=Tree(1, left=Tree(0), right=Tree(2)),
                right=Tree(5, left=Tree(4), right=Tree(6))),
        Tree(2, left=Tree(0, right=Tree(1)), right=Tree(4, left=Tree(3))),
    ]
    (feat_flat_idx, left_pos, right_pos, root_pos,
     has_left, has_right) = flatten_forest(forest, num_obj)
    (slot_feat_idx, slot_valid, slot_has_left, slot_has_right,
     lslot, rslot, post2slot, root_slot, w_pad) = build_level_schedule(
        feat_flat_idx, left_pos, right_pos, root_pos, has_left, has_right)

    final, hidden = root_centric_tree_lstm(
        jnp.asarray(slot_feat_idx), jnp.asarray(slot_valid),
        jnp.asarray(slot_has_left), jnp.asarray(slot_has_right),
        jnp.asarray(lslot), jnp.asarray(rslot),
        jnp.asarray(post2slot), jnp.asarray(root_slot),
        jnp.asarray(features_flat),
        jnp.asarray(Wx.T), jnp.asarray(bx),
        jnp.asarray(WhL.T), jnp.asarray(bhl),
        jnp.asarray(WhR.T), jnp.asarray(bhr),
        w_pad=int(w_pad))
    final = jax.block_until_ready(final)
    hidden = jax.block_until_ready(hidden)

    # Same default-precision projection the wrapper computes, then exact recursion.
    proj_np = np.asarray(jnp.dot(jnp.asarray(features_flat), jnp.asarray(Wx.T))
                         + jnp.asarray(bx))
    ref_hidden, ref_final = reference(proj_np, feat_flat_idx, left_pos, right_pos,
                                      root_pos, has_left, has_right,
                                      WhL, bhl, WhR, bhr)
    np.testing.assert_allclose(np.asarray(hidden), ref_hidden, rtol=1e-3, atol=1e-3)
    np.testing.assert_allclose(np.asarray(final), ref_final, rtol=1e-3, atol=1e-3)

    print("KERNEL_OK")
</pallas_src>

<mosaic_0001>
module attributes {stable_mosaic.version = 11 : i64} {
  func.func @tree_lstm_kernel(%arg0: i32, %arg1: memref<24xi32, #tpu.memory_space<smem>>, %arg2: memref<24xi32, #tpu.memory_space<smem>>, %arg3: memref<12xi32, #tpu.memory_space<smem>>, %arg4: memref<2xi32, #tpu.memory_space<smem>>, %arg5: memref<24x160xf32, #tpu.memory_space<vmem>>, %arg6: memref<64x160xf32, #tpu.memory_space<vmem>>, %arg7: memref<12x32xf32, #tpu.memory_space<vmem>>, %arg8: memref<2x32xf32, #tpu.memory_space<vmem>>, %arg9: memref<25x64xf32, #tpu.memory_space<vmem>>, %arg10: memref<8x64xf32, #tpu.memory_space<vmem>>, %arg11: memref<8x64xf32, #tpu.memory_space<vmem>>) attributes {dimension_semantics = [#tpu.dimension_semantics<arbitrary>], iteration_bounds = array<i64: 1>, scalar_prefetch = 4 : i64, scratch_operands = 3 : i64, tpu.core_type = #tpu.core_type<tc>, window_params = [{pipeline_mode = #tpu.pipeline_mode<synchronous>, transform_indices = @transform_0, window_bounds = array<i64: 24, 160>}, {pipeline_mode = #tpu.pipeline_mode<synchronous>, transform_indices = @transform_1, window_bounds = array<i64: 64, 160>}, {pipeline_mode = #tpu.pipeline_mode<synchronous>, transform_indices = @transform_2, window_bounds = array<i64: 12, 32>}, {pipeline_mode = #tpu.pipeline_mode<synchronous>, transform_indices = @transform_3, window_bounds = array<i64: 2, 32>}]} {
    %cst = arith.constant 0.000000e+00 : f32
    %0 = vector.broadcast %cst : f32 to vector<1x64xf32>
    %c24 = arith.constant 24 : index
    %c0 = arith.constant 0 : index
    %1 = vector.load %arg9[%c24, %c0] : memref<25x64xf32, #tpu.memory_space<vmem>>, vector<1x64xf32>
    tpu.vector_store %arg9[%c24, %c0], %0 {strides = array<i32>} : memref<25x64xf32, #tpu.memory_space<vmem>>, vector<1x64xf32>,
    %c0_0 = arith.constant 0 : index
    %c0_1 = arith.constant 0 : index
    %2 = vector.load %arg6[%c0_0, %c0_1] : memref<64x160xf32, #tpu.memory_space<vmem>>, vector<64x160xf32>
    %c0_i32 = arith.constant 0 : i32
    %c3_i32 = arith.constant 3 : i32
    %3 = arith.addi %c0_i32, %c3_i32 : i32
    %c1_i32 = arith.constant 1 : i32
    scf.for %arg12 = %c0_i32 to %3 step %c1_i32  : i32 {
      %c8_i32 = arith.constant 8 : i32
      %74 = arith.muli %arg12, %c8_i32 : i32
      %75 = tpu.assume_multiple %74, 8 : i32
      %c0_i32_48 = arith.constant 0 : i32
      %76 = arith.addi %75, %c0_i32_48 : i32
      %77 = arith.index_cast %76 : i32 to index
      %78 = memref.load %arg1[%77] : memref<24xi32, #tpu.memory_space<smem>>
      %79 = arith.index_cast %78 : i32 to index
      %c0_49 = arith.constant 0 : index
      %80 = vector.load %arg9[%79, %c0_49] : memref<25x64xf32, #tpu.memory_space<vmem>>, vector<1x64xf32>
      %c0_50 = arith.constant 0 : index
      %c0_51 = arith.constant 0 : index
      %81 = vector.load %arg10[%c0_50, %c0_51] : memref<8x64xf32, #tpu.memory_space<vmem>>, vector<1x64xf32>
      tpu.vector_store %arg10[%c0_50, %c0_51], %80 {strides = array<i32>} : memref<8x64xf32, #tpu.memory_space<vmem>>, vector<1x64xf32>,
      %82 = arith.index_cast %76 : i32 to index
      %83 = memref.load %arg2[%82] : memref<24xi32, #tpu.memory_space<smem>>
      %84 = arith.index_cast %83 : i32 to index
      %c0_52 = arith.constant 0 : index
      %85 = vector.load %arg9[%84, %c0_52] : memref<25x64xf32, #tpu.memory_space<vmem>>, vector<1x64xf32>
      %c0_53 = arith.constant 0 : index
      %c0_54 = arith.constant 0 : index
      %86 = vector.load %arg11[%c0_53, %c0_54] : memref<8x64xf32, #tpu.memory_space<vmem>>, vector<1x64xf32>
      tpu.vector_store %arg11[%c0_53, %c0_54], %85 {strides = array<i32>} : memref<8x64xf32, #tpu.memory_space<vmem>>, vector<1x64xf32>,
      %c1_i32_55 = arith.constant 1 : i32
      %87 = arith.addi %75, %c1_i32_55 : i32
      %88 = arith.index_cast %87 : i32 to index
      %89 = memref.load %arg1[%88] : memref<24xi32, #tpu.memory_space<smem>>
      %90 = arith.index_cast %89 : i32 to index
      %c0_56 = arith.constant 0 : index
      %91 = vector.load %arg9[%90, %c0_56] : memref<25x64xf32, #tpu.memory_space<vmem>>, vector<1x64xf32>
      %c1_57 = arith.constant 1 : index
      %c0_58 = arith.constant 0 : index
      %92 = vector.load %arg10[%c1_57, %c0_58] : memref<8x64xf32, #tpu.memory_space<vmem>>, vector<1x64xf32>
      tpu.vector_store %arg10[%c1_57, %c0_58], %91 {strides = array<i32>} : memref<8x64xf32, #tpu.memory_space<vmem>>, vector<1x64xf32>,
      %93 = arith.index_cast %87 : i32 to index
      %94 = memref.load %arg2[%93] : memref<24xi32, #tpu.memory_space<smem>>
      %95 = arith.index_cast %94 : i32 to index
      %c0_59 = arith.constant 0 : index
      %96 = vector.load %arg9[%95, %c0_59] : memref<25x64xf32, #tpu.memory_space<vmem>>, vector<1x64xf32>
      %c1_60 = arith.constant 1 : index
      %c0_61 = arith.constant 0 : index
      %97 = vector.load %arg11[%c1_60, %c0_61] : memref<8x64xf32, #tpu.memory_space<vmem>>, vector<1x64xf32>
      tpu.vector_store %arg11[%c1_60, %c0_61], %96 {strides = array<i32>} : memref<8x64xf32, #tpu.memory_space<vmem>>, vector<1x64xf32>,
      %c2_i32 = arith.constant 2 : i32
      %98 = arith.addi %75, %c2_i32 : i32
      %99 = arith.index_cast %98 : i32 to index
      %100 = memref.load %arg1[%99] : memref<24xi32, #tpu.memory_space<smem>>
      %101 = arith.index_cast %100 : i32 to index
      %c0_62 = arith.constant 0 : index
      %102 = vector.load %arg9[%101, %c0_62] : memref<25x64xf32, #tpu.memory_space<vmem>>, vector<1x64xf32>
      %c2_63 = arith.constant 2 : index
      %c0_64 = arith.constant 0 : index
      %103 = vector.load %arg10[%c2_63, %c0_64] : memref<8x64xf32, #tpu.memory_space<vmem>>, vector<1x64xf32>
      tpu.vector_store %arg10[%c2_63, %c0_64], %102 {strides = array<i32>} : memref<8x64xf32, #tpu.memory_space<vmem>>, vector<1x64xf32>,
      %104 = arith.index_cast %98 : i32 to index
      %105 = memref.load %arg2[%104] : memref<24xi32, #tpu.memory_space<smem>>
      %106 = arith.index_cast %105 : i32 to index
      %c0_65 = arith.constant 0 : index
      %107 = vector.load %arg9[%106, %c0_65] : memref<25x64xf32, #tpu.memory_space<vmem>>, vector<1x64xf32>
      %c2_66 = arith.constant 2 : index
      %c0_67 = arith.constant 0 : index
      %108 = vector.load %arg11[%c2_66, %c0_67] : memref<8x64xf32, #tpu.memory_space<vmem>>, vector<1x64xf32>
      tpu.vector_store %arg11[%c2_66, %c0_67], %107 {strides = array<i32>} : memref<8x64xf32, #tpu.memory_space<vmem>>, vector<1x64xf32>,
      %c3_i32_68 = arith.constant 3 : i32
      %109 = arith.addi %75, %c3_i32_68 : i32
      %110 = arith.index_cast %109 : i32 to index
      %111 = memref.load %arg1[%110] : memref<24xi32, #tpu.memory_space<smem>>
      %112 = arith.index_cast %111 : i32 to index
      %c0_69 = arith.constant 0 : index
      %113 = vector.load %arg9[%112, %c0_69] : memref<25x64xf32, #tpu.memory_space<vmem>>, vector<1x64xf32>
      %c3_70 = arith.constant 3 : index
      %c0_71 = arith.constant 0 : index
      %114 = vector.load %arg10[%c3_70, %c0_71] : memref<8x64xf32, #tpu.memory_space<vmem>>, vector<1x64xf32>
      tpu.vector_store %arg10[%c3_70, %c0_71], %113 {strides = array<i32>} : memref<8x64xf32, #tpu.memory_space<vmem>>, vector<1x64xf32>,
      %115 = arith.index_cast %109 : i32 to index
      %116 = memref.load %arg2[%115] : memref<24xi32, #tpu.memory_space<smem>>
      %117 = arith.index_cast %116 : i32 to index
      %c0_72 = arith.constant 0 : index
      %118 = vector.load %arg9[%117, %c0_72] : memref<25x64xf32, #tpu.memory_space<vmem>>, vector<1x64xf32>
      %c3_73 = arith.constant 3 : index
      %c0_74 = arith.constant 0 : index
      %119 = vector.load %arg11[%c3_73, %c0_74] : memref<8x64xf32, #tpu.memory_space<vmem>>, vector<1x64xf32>
      tpu.vector_store %arg11[%c3_73, %c0_74], %118 {strides = array<i32>} : memref<8x64xf32, #tpu.memory_space<vmem>>, vector<1x64xf32>,
      %c4_i32 = arith.constant 4 : i32
      %120 = arith.addi %75, %c4_i32 : i32
      %121 = arith.index_cast %120 : i32 to index
      %122 = memref.load %arg1[%121] : memref<24xi32, #tpu.memory_space<smem>>
      %123 = arith.index_cast %122 : i32 to index
      %c0_75 = arith.constant 0 : index
      %124 = vector.load %arg9[%123, %c0_75] : memref<25x64xf32, #tpu.memory_space<vmem>>, vector<1x64xf32>
      %c4_76 = arith.constant 4 : index
      %c0_77 = arith.constant 0 : index
      %125 = vector.load %arg10[%c4_76, %c0_77] : memref<8x64xf32, #tpu.memory_space<vmem>>, vector<1x64xf32>
      tpu.vector_store %arg10[%c4_76, %c0_77], %124 {strides = array<i32>} : memref<8x64xf32, #tpu.memory_space<vmem>>, vector<1x64xf32>,
      %126 = arith.index_cast %120 : i32 to index
      %127 = memref.load %arg2[%126] : memref<24xi32, #tpu.memory_space<smem>>
      %128 = arith.index_cast %127 : i32 to index
      %c0_78 = arith.constant 0 : index
      %129 = vector.load %arg9[%128, %c0_78] : memref<25x64xf32, #tpu.memory_space<vmem>>, vector<1x64xf32>
      %c4_79 = arith.constant 4 : index
      %c0_80 = arith.constant 0 : index
      %130 = vector.load %arg11[%c4_79, %c0_80] : memref<8x64xf32, #tpu.memory_space<vmem>>, vector<1x64xf32>
      tpu.vector_store %arg11[%c4_79, %c0_80], %129 {strides = array<i32>} : memref<8x64xf32, #tpu.memory_space<vmem>>, vector<1x64xf32>,
      %c5_i32 = arith.constant 5 : i32
      %131 = arith.addi %75, %c5_i32 : i32
      %132 = arith.index_cast %131 : i32 to index
      %133 = memref.load %arg1[%132] : memref<24xi32, #tpu.memory_space<smem>>
      %134 = arith.index_cast %133 : i32 to index
      %c0_81 = arith.constant 0 : index
      %135 = vector.load %arg9[%134, %c0_81] : memref<25x64xf32, #tpu.memory_space<vmem>>, vector<1x64xf32>
      %c5_82 = arith.constant 5 : index
      %c0_83 = arith.constant 0 : index
      %136 = vector.load %arg10[%c5_82, %c0_83] : memref<8x64xf32, #tpu.memory_space<vmem>>, vector<1x64xf32>
      tpu.vector_store %arg10[%c5_82, %c0_83], %135 {strides = array<i32>} : memref<8x64xf32, #tpu.memory_space<vmem>>, vector<1x64xf32>,
      %137 = arith.index_cast %131 : i32 to index
      %138 = memref.load %arg2[%137] : memref<24xi32, #tpu.memory_space<smem>>
      %139 = arith.index_cast %138 : i32 to index
      %c0_84 = arith.constant 0 : index
      %140 = vector.load %arg9[%139, %c0_84] : memref<25x64xf32, #tpu.memory_space<vmem>>, vector<1x64xf32>
      %c5_85 = arith.constant 5 : index
      %c0_86 = arith.constant 0 : index
      %141 = vector.load %arg11[%c5_85, %c0_86] : memref<8x64xf32, #tpu.memory_space<vmem>>, vector<1x64xf32>
      tpu.vector_store %arg11[%c5_85, %c0_86], %140 {strides = array<i32>} : memref<8x64xf32, #tpu.memory_space<vmem>>, vector<1x64xf32>,
      %c6_i32 = arith.constant 6 : i32
      %142 = arith.addi %75, %c6_i32 : i32
      %143 = arith.index_cast %142 : i32 to index
      %144 = memref.load %arg1[%143] : memref<24xi32, #tpu.memory_space<smem>>
      %145 = arith.index_cast %144 : i32 to index
      %c0_87 = arith.constant 0 : index
      %146 = vector.load %arg9[%145, %c0_87] : memref<25x64xf32, #tpu.memory_space<vmem>>, vector<1x64xf32>
      %c6_88 = arith.constant 6 : index
      %c0_89 = arith.constant 0 : index
      %147 = vector.load %arg10[%c6_88, %c0_89] : memref<8x64xf32, #tpu.memory_space<vmem>>, vector<1x64xf32>
      tpu.vector_store %arg10[%c6_88, %c0_89], %146 {strides = array<i32>} : memref<8x64xf32, #tpu.memory_space<vmem>>, vector<1x64xf32>,
      %148 = arith.index_cast %142 : i32 to index
      %149 = memref.load %arg2[%148] : memref<24xi32, #tpu.memory_space<smem>>
      %150 = arith.index_cast %149 : i32 to index
      %c0_90 = arith.constant 0 : index
      %151 = vector.load %arg9[%150, %c0_90] : memref<25x64xf32, #tpu.memory_space<vmem>>, vector<1x64xf32>
      %c6_91 = arith.constant 6 : index
      %c0_92 = arith.constant 0 : index
      %152 = vector.load %arg11[%c6_91, %c0_92] : memref<8x64xf32, #tpu.memory_space<vmem>>, vector<1x64xf32>
      tpu.vector_store %arg11[%c6_91, %c0_92], %151 {strides = array<i32>} : memref<8x64xf32, #tpu.memory_space<vmem>>, vector<1x64xf32>,
      %c7_i32 = arith.constant 7 : i32
      %153 = arith.addi %75, %c7_i32 : i32
      %154 = arith.index_cast %153 : i32 to index
      %155 = memref.load %arg1[%154] : memref<24xi32, #tpu.memory_space<smem>>
      %156 = arith.index_cast %155 : i32 to index
      %c0_93 = arith.constant 0 : index
      %157 = vector.load %arg9[%156, %c0_93] : memref<25x64xf32, #tpu.memory_space<vmem>>, vector<1x64xf32>
      %c7_94 = arith.constant 7 : index
      %c0_95 = arith.constant 0 : index
      %158 = vector.load %arg10[%c7_94, %c0_95] : memref<8x64xf32, #tpu.memory_space<vmem>>, vector<1x64xf32>
      tpu.vector_store %arg10[%c7_94, %c0_95], %157 {strides = array<i32>} : memref<8x64xf32, #tpu.memory_space<vmem>>, vector<1x64xf32>,
      %159 = arith.index_cast %153 : i32 to index
      %160 = memref.load %arg2[%159] : memref<24xi32, #tpu.memory_space<smem>>
      %161 = arith.index_cast %160 : i32 to index
      %c0_96 = arith.constant 0 : index
      %162 = vector.load %arg9[%161, %c0_96] : memref<25x64xf32, #tpu.memory_space<vmem>>, vector<1x64xf32>
      %c7_97 = arith.constant 7 : index
      %c0_98 = arith.constant 0 : index
      %163 = vector.load %arg11[%c7_97, %c0_98] : memref<8x64xf32, #tpu.memory_space<vmem>>, vector<1x64xf32>
      tpu.vector_store %arg11[%c7_97, %c0_98], %162 {strides = array<i32>} : memref<8x64xf32, #tpu.memory_space<vmem>>, vector<1x64xf32>,
      %c0_99 = arith.constant 0 : index
      %c0_100 = arith.constant 0 : index
      %164 = vector.load %arg10[%c0_99, %c0_100] : memref<8x64xf32, #tpu.memory_space<vmem>>, vector<8x64xf32>
      %c0_101 = arith.constant 0 : index
      %c0_102 = arith.constant 0 : index
      %165 = vector.load %arg11[%c0_101, %c0_102] : memref<8x64xf32, #tpu.memory_space<vmem>>, vector<8x64xf32>
      %166 = vector.extract_strided_slice %164 {offsets = [0, 0], sizes = [8, 32], strides = [1, 1]} : vector<8x64xf32> to vector<8x32xf32>
      %167 = vector.extract_strided_slice %164 {offsets = [0, 32], sizes = [8, 32], strides = [1, 1]} : vector<8x64xf32> to vector<8x32xf32>
      %168 = vector.extract_strided_slice %165 {offsets = [0, 0], sizes = [8, 32], strides = [1, 1]} : vector<8x64xf32> to vector<8x32xf32>
      %169 = vector.extract_strided_slice %165 {offsets = [0, 32], sizes = [8, 32], strides = [1, 1]} : vector<8x64xf32> to vector<8x32xf32>
      %170 = tpu.concatenate %167, %169 in 1 : vector<8x32xf32>, vector<8x32xf32> -> vector<8x64xf32>
      %171 = arith.index_cast %75 : i32 to index
      %c0_103 = arith.constant 0 : index
      %172 = vector.load %arg5[%171, %c0_103] : memref<24x160xf32, #tpu.memory_space<vmem>>, vector<8x160xf32>
      %cst_104 = arith.constant dense<0.000000e+00> : vector<8x160xf32>
      %173 = tpu.matmul %170, %2, %cst_104 {dimension_numbers = #tpu.dot_dimension_numbers<[1], [0], [0], [1], [0, 0, 1, 1], [], []>} : vector<8x64xf32>, vector<64x160xf32>, vector<8x160xf32> -> vector<8x160xf32>
      %174 = arith.addf %172, %173 : vector<8x160xf32>
      %175 = arith.negf %174 : vector<8x160xf32>
      %176 = math.exp %175 : vector<8x160xf32>
      %cst_105 = arith.constant 1.000000e+00 : f32
      %177 = vector.broadcast %cst_105 : f32 to vector<8x160xf32>
      %178 = arith.addf %177, %176 : vector<8x160xf32>
      %179 = arith.divf %177, %178 : vector<8x160xf32>
      %180 = vector.extract_strided_slice %179 {offsets = [0, 0], sizes = [8, 32], strides = [1, 1]} : vector<8x160xf32> to vector<8x32xf32>
      %181 = vector.extract_strided_slice %179 {offsets = [0, 32], sizes = [8, 32], strides = [1, 1]} : vector<8x160xf32> to vector<8x32xf32>
      %182 = vector.extract_strided_slice %179 {offsets = [0, 64], sizes = [8, 32], strides = [1, 1]} : vector<8x160xf32> to vector<8x32xf32>
      %183 = vector.extract_strided_slice %179 {offsets = [0, 96], sizes = [8, 32], strides = [1, 1]} : vector<8x160xf32> to vector<8x32xf32>
      %184 = vector.extract_strided_slice %179 {offsets = [0, 128], sizes = [8, 32], strides = [1, 1]} : vector<8x160xf32> to vector<8x32xf32>
      %cst_106 = arith.constant 2.000000e+00 : f32
      %185 = vector.broadcast %cst_106 : f32 to vector<8x32xf32>
      %186 = arith.mulf %185, %184 : vector<8x32xf32>
      %cst_107 = arith.constant 1.000000e+00 : f32
      %187 = vector.broadcast %cst_107 : f32 to vector<8x32xf32>
      %188 = arith.subf %186, %187 : vector<8x32xf32>
      %189 = arith.mulf %180, %188 : vector<8x32xf32>
      %190 = arith.mulf %182, %166 : vector<8x32xf32>
      %191 = arith.addf %189, %190 : vector<8x32xf32>
      %192 = arith.mulf %183, %168 : vector<8x32xf32>
      %193 = arith.addf %191, %192 : vector<8x32xf32>
      %194 = math.tanh %193 : vector<8x32xf32>
      %195 = arith.mulf %181, %194 : vector<8x32xf32>
      %196 = tpu.concatenate %193, %195 in 1 : vector<8x32xf32>, vector<8x32xf32> -> vector<8x64xf32>
      %197 = arith.index_cast %75 : i32 to index
      %c0_108 = arith.constant 0 : index
      %198 = vector.load %arg9[%197, %c0_108] : memref<25x64xf32, #tpu.memory_space<vmem>>, vector<8x64xf32>
      tpu.vector_store %arg9[%197, %c0_108], %196 {strides = array<i32>} : memref<25x64xf32, #tpu.memory_space<vmem>>, vector<8x64xf32>,
    }
    %c3_i32_2 = arith.constant 3 : i32
    %c0_3 = arith.constant 0 : index
    %4 = memref.load %arg3[%c0_3] : memref<12xi32, #tpu.memory_space<smem>>
    %5 = arith.index_cast %4 : i32 to index
    %c0_4 = arith.constant 0 : index
    %6 = vector.load %arg9[%5, %c0_4] : memref<25x64xf32, #tpu.memory_space<vmem>>, vector<1x64xf32>
    %7 = vector.extract_strided_slice %6 {offsets = [0, 32], sizes = [1, 32], strides = [1, 1]} : vector<1x64xf32> to vector<1x32xf32>
    %c0_5 = arith.constant 0 : index
    %c0_6 = arith.constant 0 : index
    %8 = vector.load %arg7[%c0_5, %c0_6] : memref<12x32xf32, #tpu.memory_space<vmem>>, vector<1x32xf32>
    tpu.vector_store %arg7[%c0_5, %c0_6], %7 {strides = array<i32>} : memref<12x32xf32, #tpu.memory_space<vmem>>, vector<1x32xf32>,
    %c1 = arith.constant 1 : index
    %9 = memref.load %arg3[%c1] : memref<12xi32, #tpu.memory_space<smem>>
    %10 = arith.index_cast %9 : i32 to index
    %c0_7 = arith.constant 0 : index
    %11 = vector.load %arg9[%10, %c0_7] : memref<25x64xf32, #tpu.memory_space<vmem>>, vector<1x64xf32>
    %12 = vector.extract_strided_slice %11 {offsets = [0, 32], sizes = [1, 32], strides = [1, 1]} : vector<1x64xf32> to vector<1x32xf32>
    %c1_8 = arith.constant 1 : index
    %c0_9 = arith.constant 0 : index
    %13 = vector.load %arg7[%c1_8, %c0_9] : memref<12x32xf32, #tpu.memory_space<vmem>>, vector<1x32xf32>
    tpu.vector_store %arg7[%c1_8, %c0_9], %12 {strides = array<i32>} : memref<12x32xf32, #tpu.memory_space<vmem>>, vector<1x32xf32>,
    %c2 = arith.constant 2 : index
    %14 = memref.load %arg3[%c2] : memref<12xi32, #tpu.memory_space<smem>>
    %15 = arith.index_cast %14 : i32 to index
    %c0_10 = arith.constant 0 : index
    %16 = vector.load %arg9[%15, %c0_10] : memref<25x64xf32, #tpu.memory_space<vmem>>, vector<1x64xf32>
    %17 = vector.extract_strided_slice %16 {offsets = [0, 32], sizes = [1, 32], strides = [1, 1]} : vector<1x64xf32> to vector<1x32xf32>
    %c2_11 = arith.constant 2 : index
    %c0_12 = arith.constant 0 : index
    %18 = vector.load %arg7[%c2_11, %c0_12] : memref<12x32xf32, #tpu.memory_space<vmem>>, vector<1x32xf32>
    tpu.vector_store %arg7[%c2_11, %c0_12], %17 {strides = array<i32>} : memref<12x32xf32, #tpu.memory_space<vmem>>, vector<1x32xf32>,
    %c3 = arith.constant 3 : index
    %19 = memref.load %arg3[%c3] : memref<12xi32, #tpu.memory_space<smem>>
    %20 = arith.index_cast %19 : i32 to index
    %c0_13 = arith.constant 0 : index
    %21 = vector.load %arg9[%20, %c0_13] : memref<25x64xf32, #tpu.memory_space<vmem>>, vector<1x64xf32>
    %22 = vector.extract_strided_slice %21 {offsets = [0, 32], sizes = [1, 32], strides = [1, 1]} : vector<1x64xf32> to vector<1x32xf32>
    %c3_14 = arith.constant 3 : index
    %c0_15 = arith.constant 0 : index
    %23 = vector.load %arg7[%c3_14, %c0_15] : memref<12x32xf32, #tpu.memory_space<vmem>>, vector<1x32xf32>
    tpu.vector_store %arg7[%c3_14, %c0_15], %22 {strides = array<i32>} : memref<12x32xf32, #tpu.memory_space<vmem>>, vector<1x32xf32>,
    %c4 = arith.constant 4 : index
    %24 = memref.load %arg3[%c4] : memref<12xi32, #tpu.memory_space<smem>>
    %25 = arith.index_cast %24 : i32 to index
    %c0_16 = arith.constant 0 : index
    %26 = vector.load %arg9[%25, %c0_16] : memref<25x64xf32, #tpu.memory_space<vmem>>, vector<1x64xf32>
    %27 = vector.extract_strided_slice %26 {offsets = [0, 32], sizes = [1, 32], strides = [1, 1]} : vector<1x64xf32> to vector<1x32xf32>
    %c4_17 = arith.constant 4 : index
    %c0_18 = arith.constant 0 : index
    %28 = vector.load %arg7[%c4_17, %c0_18] : memref<12x32xf32, #tpu.memory_space<vmem>>, vector<1x32xf32>
    tpu.vector_store %arg7[%c4_17, %c0_18], %27 {strides = array<i32>} : memref<12x32xf32, #tpu.memory_space<vmem>>, vector<1x32xf32>,
    %c5 = arith.constant 5 : index
    %29 = memref.load %arg3[%c5] : memref<12xi32, #tpu.memory_space<smem>>
    %30 = arith.index_cast %29 : i32 to index
    %c0_19 = arith.constant 0 : index
    %31 = vector.load %arg9[%30, %c0_19] : memref<25x64xf32, #tpu.memory_space<vmem>>, vector<1x64xf32>
    %32 = vector.extract_strided_slice %31 {offsets = [0, 32], sizes = [1, 32], strides = [1, 1]} : vector<1x64xf32> to vector<1x32xf32>
    %c5_20 = arith.constant 5 : index
    %c0_21 = arith.constant 0 : index
    %33 = vector.load %arg7[%c5_20, %c0_21] : memref<12x32xf32, #tpu.memory_space<vmem>>, vector<1x32xf32>
    tpu.vector_store %arg7[%c5_20, %c0_21], %32 {strides = array<i32>} : memref<12x32xf32, #tpu.memory_space<vmem>>, vector<1x32xf32>,
    %c6 = arith.constant 6 : index
    %34 = memref.load %arg3[%c6] : memref<12xi32, #tpu.memory_space<smem>>
    %35 = arith.index_cast %34 : i32 to index
    %c0_22 = arith.constant 0 : index
    %36 = vector.load %arg9[%35, %c0_22] : memref<25x64xf32, #tpu.memory_space<vmem>>, vector<1x64xf32>
    %37 = vector.extract_strided_slice %36 {offsets = [0, 32], sizes = [1, 32], strides = [1, 1]} : vector<1x64xf32> to vector<1x32xf32>
    %c6_23 = arith.constant 6 : index
    %c0_24 = arith.constant 0 : index
    %38 = vector.load %arg7[%c6_23, %c0_24] : memref<12x32xf32, #tpu.memory_space<vmem>>, vector<1x32xf32>
    tpu.vector_store %arg7[%c6_23, %c0_24], %37 {strides = array<i32>} : memref<12x32xf32, #tpu.memory_space<vmem>>, vector<1x32xf32>,
    %c7 = arith.constant 7 : index
    %39 = memref.load %arg3[%c7] : memref<12xi32, #tpu.memory_space<smem>>
    %40 = arith.index_cast %39 : i32 to index
    %c0_25 = arith.constant 0 : index
    %41 = vector.load %arg9[%40, %c0_25] : memref<25x64xf32, #tpu.memory_space<vmem>>, vector<1x64xf32>
    %42 = vector.extract_strided_slice %41 {offsets = [0, 32], sizes = [1, 32], strides = [1, 1]} : vector<1x64xf32> to vector<1x32xf32>
    %c7_26 = arith.constant 7 : index
    %c0_27 = arith.constant 0 : index
    %43 = vector.load %arg7[%c7_26, %c0_27] : memref<12x32xf32, #tpu.memory_space<vmem>>, vector<1x32xf32>
    tpu.vector_store %arg7[%c7_26, %c0_27], %42 {strides = array<i32>} : memref<12x32xf32, #tpu.memory_space<vmem>>, vector<1x32xf32>,
    %c8 = arith.constant 8 : index
    %44 = memref.load %arg3[%c8] : memref<12xi32, #tpu.memory_space<smem>>
    %45 = arith.index_cast %44 : i32 to index
    %c0_28 = arith.constant 0 : index
    %46 = vector.load %arg9[%45, %c0_28] : memref<25x64xf32, #tpu.memory_space<vmem>>, vector<1x64xf32>
    %47 = vector.extract_strided_slice %46 {offsets = [0, 32], sizes = [1, 32], strides = [1, 1]} : vector<1x64xf32> to vector<1x32xf32>
    %c8_29 = arith.constant 8 : index
    %c0_30 = arith.constant 0 : index
    %48 = vector.load %arg7[%c8_29, %c0_30] : memref<12x32xf32, #tpu.memory_space<vmem>>, vector<1x32xf32>
    tpu.vector_store %arg7[%c8_29, %c0_30], %47 {strides = array<i32>} : memref<12x32xf32, #tpu.memory_space<vmem>>, vector<1x32xf32>,
    %c9 = arith.constant 9 : index
    %49 = memref.load %arg3[%c9] : memref<12xi32, #tpu.memory_space<smem>>
    %50 = arith.index_cast %49 : i32 to index
    %c0_31 = arith.constant 0 : index
    %51 = vector.load %arg9[%50, %c0_31] : memref<25x64xf32, #tpu.memory_space<vmem>>, vector<1x64xf32>
    %52 = vector.extract_strided_slice %51 {offsets = [0, 32], sizes = [1, 32], strides = [1, 1]} : vector<1x64xf32> to vector<1x32xf32>
    %c9_32 = arith.constant 9 : index
    %c0_33 = arith.constant 0 : index
    %53 = vector.load %arg7[%c9_32, %c0_33] : memref<12x32xf32, #tpu.memory_space<vmem>>, vector<1x32xf32>
    tpu.vector_store %arg7[%c9_32, %c0_33], %52 {strides = array<i32>} : memref<12x32xf32, #tpu.memory_space<vmem>>, vector<1x32xf32>,
    %c10 = arith.constant 10 : index
    %54 = memref.load %arg3[%c10] : memref<12xi32, #tpu.memory_space<smem>>
    %55 = arith.index_cast %54 : i32 to index
    %c0_34 = arith.constant 0 : index
    %56 = vector.load %arg9[%55, %c0_34] : memref<25x64xf32, #tpu.memory_space<vmem>>, vector<1x64xf32>
    %57 = vector.extract_strided_slice %56 {offsets = [0, 32], sizes = [1, 32], strides = [1, 1]} : vector<1x64xf32> to vector<1x32xf32>
    %c10_35 = arith.constant 10 : index
    %c0_36 = arith.constant 0 : index
    %58 = vector.load %arg7[%c10_35, %c0_36] : memref<12x32xf32, #tpu.memory_space<vmem>>, vector<1x32xf32>
    tpu.vector_store %arg7[%c10_35, %c0_36], %57 {strides = array<i32>} : memref<12x32xf32, #tpu.memory_space<vmem>>, vector<1x32xf32>,
    %c11 = arith.constant 11 : index
    %59 = memref.load %arg3[%c11] : memref<12xi32, #tpu.memory_space<smem>>
    %60 = arith.index_cast %59 : i32 to index
    %c0_37 = arith.constant 0 : index
    %61 = vector.load %arg9[%60, %c0_37] : memref<25x64xf32, #tpu.memory_space<vmem>>, vector<1x64xf32>
    %62 = vector.extract_strided_slice %61 {offsets = [0, 32], sizes = [1, 32], strides = [1, 1]} : vector<1x64xf32> to vector<1x32xf32>
    %c11_38 = arith.constant 11 : index
    %c0_39 = arith.constant 0 : index
    %63 = vector.load %arg7[%c11_38, %c0_39] : memref<12x32xf32, #tpu.memory_space<vmem>>, vector<1x32xf32>
    tpu.vector_store %arg7[%c11_38, %c0_39], %62 {strides = array<i32>} : memref<12x32xf32, #tpu.memory_space<vmem>>, vector<1x32xf32>,
    %c0_40 = arith.constant 0 : index
    %64 = memref.load %arg4[%c0_40] : memref<2xi32, #tpu.memory_space<smem>>
    %65 = arith.index_cast %64 : i32 to index
    %c0_41 = arith.constant 0 : index
    %66 = vector.load %arg9[%65, %c0_41] : memref<25x64xf32, #tpu.memory_space<vmem>>, vector<1x64xf32>
    %67 = vector.extract_strided_slice %66 {offsets = [0, 32], sizes = [1, 32], strides = [1, 1]} : vector<1x64xf32> to vector<1x32xf32>
    %c0_42 = arith.constant 0 : index
    %c0_43 = arith.constant 0 : index
    %68 = vector.load %arg8[%c0_42, %c0_43] : memref<2x32xf32, #tpu.memory_space<vmem>>, vector<1x32xf32>
    tpu.vector_store %arg8[%c0_42, %c0_43], %67 {strides = array<i32>} : memref<2x32xf32, #tpu.memory_space<vmem>>, vector<1x32xf32>,
    %c1_44 = arith.constant 1 : index
    %69 = memref.load %arg4[%c1_44] : memref<2xi32, #tpu.memory_space<smem>>
    %70 = arith.index_cast %69 : i32 to index
    %c0_45 = arith.constant 0 : index
    %71 = vector.load %arg9[%70, %c0_45] : memref<25x64xf32, #tpu.memory_space<vmem>>, vector<1x64xf32>
    %72 = vector.extract_strided_slice %71 {offsets = [0, 32], sizes = [1, 32], strides = [1, 1]} : vector<1x64xf32> to vector<1x32xf32>
    %c1_46 = arith.constant 1 : index
    %c0_47 = arith.constant 0 : index
    %73 = vector.load %arg8[%c1_46, %c0_47] : memref<2x32xf32, #tpu.memory_space<vmem>>, vector<1x32xf32>
    tpu.vector_store %arg8[%c1_46, %c0_47], %72 {strides = array<i32>} : memref<2x32xf32, #tpu.memory_space<vmem>>, vector<1x32xf32>,
    return
  }
  func.func @transform_0(%arg0: i32, %arg1: memref<24xi32, #tpu.memory_space<smem>>, %arg2: memref<24xi32, #tpu.memory_space<smem>>, %arg3: memref<12xi32, #tpu.memory_space<smem>>, %arg4: memref<2xi32, #tpu.memory_space<smem>>) -> (i32, i32) {
    %c0_i32 = arith.constant 0 : i32
    %c0_i32_0 = arith.constant 0 : i32
    %c0_i32_1 = arith.constant 0 : i32
    return %c0_i32, %c0_i32_0 : i32, i32
  }
  func.func @transform_1(%arg0: i32, %arg1: memref<24xi32, #tpu.memory_space<smem>>, %arg2: memref<24xi32, #tpu.memory_space<smem>>, %arg3: memref<12xi32, #tpu.memory_space<smem>>, %arg4: memref<2xi32, #tpu.memory_space<smem>>) -> (i32, i32) {
    %c0_i32 = arith.constant 0 : i32
    %c0_i32_0 = arith.constant 0 : i32
    %c0_i32_1 = arith.constant 0 : i32
    return %c0_i32, %c0_i32_0 : i32, i32
  }
  func.func @transform_2(%arg0: i32, %arg1: memref<24xi32, #tpu.memory_space<smem>>, %arg2: memref<24xi32, #tpu.memory_space<smem>>, %arg3: memref<12xi32, #tpu.memory_space<smem>>, %arg4: memref<2xi32, #tpu.memory_space<smem>>) -> (i32, i32) {
    %c0_i32 = arith.constant 0 : i32
    %c0_i32_0 = arith.constant 0 : i32
    %c0_i32_1 = arith.constant 0 : i32
    return %c0_i32, %c0_i32_0 : i32, i32
  }
  func.func @transform_3(%arg0: i32, %arg1: memref<24xi32, #tpu.memory_space<smem>>, %arg2: memref<24xi32, #tpu.memory_space<smem>>, %arg3: memref<12xi32, #tpu.memory_space<smem>>, %arg4: memref<2xi32, #tpu.memory_space<smem>>) -> (i32, i32) {
    %c0_i32 = arith.constant 0 : i32
    %c0_i32_0 = arith.constant 0 : i32
    %c0_i32_1 = arith.constant 0 : i32
    return %c0_i32, %c0_i32_0 : i32, i32
  }
}

</mosaic_0001>

<llo_original>
// kernel: root_centric_tree_lstm.1
$region0: #{root_centric_tree_lstm.1}
  #allocation0 [shape = 'u32[]', space=smem, size = 0x4, offset = 0x4, fixed_abs, tag = 'smem constant byte address 0x4 - core index']
  #allocation1 [shape = 'u32[144,128]{1,0:T(1,128)}', space=vmem, size = 0x12000, scoped, tag = 'internal scratch']
  #allocation2 [shape = 'f32[25,64]{1,0:T(8,128)}', space=vmem, size = 0x4000, scoped, tag = 'scratch operand']
  #allocation3 [shape = 'f32[8,64]{1,0:T(8,128)}', space=vmem, size = 0x1000, scoped, tag = 'scratch operand']
  #allocation4 [shape = 'f32[8,64]{1,0:T(8,128)}', space=vmem, size = 0x1000, scoped, tag = 'scratch operand']
  #allocation5 [shape = 's32[1]{0}', space=sflag, size = 0x4, scoped, tag = 'scoped memory for root_centric_tree_lstm.1']
  #allocation6 [shape = 'u8[512]{0}', space=smem, size = 0x200, scoped, tag = 'prefetched SMEM operand 0']
  #allocation7 [shape = 'u8[512]{0}', space=smem, size = 0x200, scoped, tag = 'prefetched SMEM operand 1']
  #allocation8 [shape = 'u8[512]{0}', space=smem, size = 0x200, scoped, tag = 'prefetched SMEM operand 2']
  #allocation9 [shape = 'u8[512]{0}', space=smem, size = 0x200, scoped, tag = 'prefetched SMEM operand 3']
  %s0 = inlined_call_operand.vmem [shape: s32[24], index: 0, kind: input, shape index: {}]
  %s1 = inlined_call_operand.vmem [shape: s32[24], index: 1, kind: input, shape index: {}]
  %s2 = inlined_call_operand.vmem [shape: s32[12], index: 2, kind: input, shape index: {}]
  %s3 = inlined_call_operand.vmem [shape: s32[2], index: 3, kind: input, shape index: {}]
  %s4 = inlined_call_operand.vmem [shape: f32[24,160], index: 4, kind: input, shape index: {}]
  %s5 = inlined_call_operand.vmem [shape: f32[64,160], index: 5, kind: input, shape index: {}]
  %s6 = inlined_call_operand.hbm [shape: f32[12,32], index: 6, kind: output, shape index: {0}]
  %s7 = inlined_call_operand.hbm [shape: f32[2,32], index: 7, kind: output, shape index: {1}]
  %8 = xla_tuple %s6, %s7
  %s9 = sld [smem:[#allocation0]]
  $region33: #{root_centric_tree_lstm.1} parent=0
    _
  %s11 = ssub.s32 1, %s9
  %s12 = scalar_select 0, %s11, %s9
  %s13 = sshll.u32 %s0, 4
  %s14 = int_to_ptr.vmem [resolvable:$true] %s13
  %16 = dma.vmem_to_smem %s14, 16, [#allocation6], [#allocation5]
  %s17 = sshll.u32 %s1, 4
  %s18 = int_to_ptr.vmem [resolvable:$true] %s17
  %20 = dma.vmem_to_smem %s18, 16, [#allocation7], [#allocation5]
  %s21 = sshll.u32 %s2, 4
  %s22 = int_to_ptr.vmem [resolvable:$true] %s21
  %24 = dma.vmem_to_smem %s22, 16, [#allocation8], [#allocation5]
  %s25 = sshll.u32 %s3, 4
  %s26 = int_to_ptr.vmem [resolvable:$true] %s25
  %28 = dma.vmem_to_smem %s26, 16, [#allocation9], [#allocation5]
  %29 = dma.done [#allocation5], 64
  %30 = sfence
  $region1: #{root_centric_tree_lstm.1} parent=0
    #allocation10 [shape = 'u8[8192]{0}', space=vmem, size = 0x2000, scoped, tag = 'output window, operand 0, single buffered']
    #allocation11 [shape = 's32[1]{0}', space=sflag, size = 0x4, scoped, tag = 'scoped memory for root_centric_tree_lstm.1']
    #allocation12 [shape = 'u8[1024]{0}', space=vmem, size = 0x400, scoped, tag = 'output window, operand 1, single buffered']
    #allocation13 [shape = 's32[1]{0}', space=sflag, size = 0x4, scoped, tag = 'scoped memory for root_centric_tree_lstm.1']
    %31 = vsyncpa [#allocation11], 0
    %32 = vsyncpa [#allocation13], 0
    // Predicated region
    $region2: #{root_centric_tree_lstm.1} parent=1 // pred_check
      _
    $region3: #{root_centric_tree_lstm.1} parent=1 // pred_check_branch
      %34 = sbr.rel (0) target = $region5
    $region4: #{root_centric_tree_lstm.1} parent=1 // pred_region
      _
    $region5: #{root_centric_tree_lstm.1} parent=1 // pred_fallthru
      _
    // Predicated region
    $region6: #{root_centric_tree_lstm.1} parent=1 // pred_check
      _
    $region7: #{root_centric_tree_lstm.1} parent=1 // pred_check_branch
      %36 = sbr.rel (0) target = $region9
    $region8: #{root_centric_tree_lstm.1} parent=1 // pred_region
      _
    $region9: #{root_centric_tree_lstm.1} parent=1 // pred_fallthru
      _
    %vm37 = vcmask 516096
    %38 = vst.msk [vmem:[#allocation2 + $0x18] sm:$0x1] %vm37, 0.0
    %v39 = vld [vmem:[%s5] sm:$0xff]
    %v40 = vld [vmem:[%s5 + $0x8] sm:$0xff]
    %v41 = vld [vmem:[%s5 + $0x10] sm:$0xff]
    %v42 = vld [vmem:[%s5 + $0x18] sm:$0xff]
    %v43 = vld [vmem:[%s5 + $0x20] sm:$0xff]
    %v44 = vld [vmem:[%s5 + $0x28] sm:$0xff]
    %v45 = vld [vmem:[%s5 + $0x30] sm:$0xff]
    %v46 = vld [vmem:[%s5 + $0x38] sm:$0xff]
    %v47 = vld [vmem:[%s5 + $0x40] sm:$0xff]
    %v48 = vld [vmem:[%s5 + $0x48] sm:$0xff]
    %v49 = vld [vmem:[%s5 + $0x50] sm:$0xff]
    %v50 = vld [vmem:[%s5 + $0x58] sm:$0xff]
    %v51 = vld [vmem:[%s5 + $0x60] sm:$0xff]
    %v52 = vld [vmem:[%s5 + $0x68] sm:$0xff]
    %v53 = vld [vmem:[%s5 + $0x70] sm:$0xff]
    %v54 = vld [vmem:[%s5 + $0x78] sm:$0xff]
    loop: start=0, step=1, limit=3
    $region10: #{root_centric_tree_lstm.1} parent=1 // loop_pre_header
      _
    $region11: #{root_centric_tree_lstm.1} parent=1 // loop_header
      %s56 = sphi 0, %s60
      %p57 = scmp.ge.s32.totalorder %s56, 3
    $region12: #{root_centric_tree_lstm.1} parent=1 // loop_header_branch
      %59 = sbr.rel (%p57) target = $region16
    $region13: #{root_centric_tree_lstm.1} parent=1 // loop_body
      %s61 = smul.u32 %s56, 8
      %s62 = sld [smem:[#allocation6 + %s61]]
      %s63 = scalar_lea.vmem [#allocation2], %s62
      %v64 = vld [vmem:[%s63] sm:$0x1]
      %65 = vst.msk [vmem:[#allocation3] sm:$0x1] %vm37, %v64
      %s66 = sld [smem:[#allocation7 + %s61]]
      %s67 = scalar_lea.vmem [#allocation2], %s66
      %v68 = vld [vmem:[%s67] sm:$0x1]
      %69 = vst.msk [vmem:[#allocation4] sm:$0x1] %vm37, %v68
      %s70 = sadd.s32 %s61, 1
      %s71 = sld [smem:[#allocation6 + %s70]]
      %s72 = scalar_lea.vmem [#allocation2], %s71
      %v73 = vld [vmem:[%s72] sm:$0x1]
      %74 = vst.msk [vmem:[#allocation3 + $0x1] sm:$0x1] %vm37, %v73
      %s75 = sld [smem:[#allocation7 + %s70]]
      %s76 = scalar_lea.vmem [#allocation2], %s75
      %v77 = vld [vmem:[%s76] sm:$0x1]
      %78 = vst.msk [vmem:[#allocation4 + $0x1] sm:$0x1] %vm37, %v77
      %s79 = sadd.s32 %s61, 2
      %s80 = sld [smem:[#allocation6 + %s79]]
      %s81 = scalar_lea.vmem [#allocation2], %s80
      %v82 = vld [vmem:[%s81] sm:$0x1]
      %83 = vst.msk [vmem:[#allocation3 + $0x2] sm:$0x1] %vm37, %v82
      %s84 = sld [smem:[#allocation7 + %s79]]
      %s85 = scalar_lea.vmem [#allocation2], %s84
      %v86 = vld [vmem:[%s85] sm:$0x1]
      %87 = vst.msk [vmem:[#allocation4 + $0x2] sm:$0x1] %vm37, %v86
      %s88 = sadd.s32 %s61, 3
      %s89 = sld [smem:[#allocation6 + %s88]]
      %s90 = scalar_lea.vmem [#allocation2], %s89
      %v91 = vld [vmem:[%s90] sm:$0x1]
      %92 = vst.msk [vmem:[#allocation3 + $0x3] sm:$0x1] %vm37, %v91
      %s93 = sld [smem:[#allocation7 + %s88]]
      %s94 = scalar_lea.vmem [#allocation2], %s93
      %v95 = vld [vmem:[%s94] sm:$0x1]
      %96 = vst.msk [vmem:[#allocation4 + $0x3] sm:$0x1] %vm37, %v95
      %s97 = sadd.s32 %s61, 4
      %s98 = sld [smem:[#allocation6 + %s97]]
      %s99 = scalar_lea.vmem [#allocation2], %s98
      %v100 = vld [vmem:[%s99] sm:$0x1]
      %101 = vst.msk [vmem:[#allocation3 + $0x4] sm:$0x1] %vm37, %v100
      %s102 = sld [smem:[#allocation7 + %s97]]
      %s103 = scalar_lea.vmem [#allocation2], %s102
      %v104 = vld [vmem:[%s103] sm:$0x1]
      %105 = vst.msk [vmem:[#allocation4 + $0x4] sm:$0x1] %vm37, %v104
      %s106 = sadd.s32 %s61, 5
      %s107 = sld [smem:[#allocation6 + %s106]]
      %s108 = scalar_lea.vmem [#allocation2], %s107
      %v109 = vld [vmem:[%s108] sm:$0x1]
      %110 = vst.msk [vmem:[#allocation3 + $0x5] sm:$0x1] %vm37, %v109
      %s111 = sld [smem:[#allocation7 + %s106]]
      %s112 = scalar_lea.vmem [#allocation2], %s111
      %v113 = vld [vmem:[%s112] sm:$0x1]
      %114 = vst.msk [vmem:[#allocation4 + $0x5] sm:$0x1] %vm37, %v113
      %s115 = sadd.s32 %s61, 6
      %s116 = sld [smem:[#allocation6 + %s115]]
      %s117 = scalar_lea.vmem [#allocation2], %s116
      %v118 = vld [vmem:[%s117] sm:$0x1]
      %119 = vst.msk [vmem:[#allocation3 + $0x6] sm:$0x1] %vm37, %v118
      %s120 = sld [smem:[#allocation7 + %s115]]
      %s121 = scalar_lea.vmem [#allocation2], %s120
      %v122 = vld [vmem:[%s121] sm:$0x1]
      %123 = vst.msk [vmem:[#allocation4 + $0x6] sm:$0x1] %vm37, %v122
      %s124 = sadd.s32 %s61, 7
      %s125 = sld [smem:[#allocation6 + %s124]]
      %s126 = scalar_lea.vmem [#allocation2], %s125
      %v127 = vld [vmem:[%s126] sm:$0x1]
      %128 = vst.msk [vmem:[#allocation3 + $0x7] sm:$0x1] %vm37, %v127
      %s129 = sld [smem:[#allocation7 + %s124]]
      %s130 = scalar_lea.vmem [#allocation2], %s129
      %v131 = vld [vmem:[%s130] sm:$0x1]
      %132 = vst.msk [vmem:[#allocation4 + $0x7] sm:$0x1] %vm37, %v131
      %v133 = vld [vmem:[#allocation3] sm:$0xff]
      %v134 = vld [vmem:[#allocation4] sm:$0xff]
      %136 = vrot.lane.b32.xlu0 %v133, 96
      %v137 = vpop.permute.xlu0 %136
      %vm139 = vcmask 261120
      %v140 = vsel %vm139, %v137, %v134
      %s141 = sshra.s32 %s61, 3
      %s142 = sand.u32 %s61, 7
      %s143 = smul.u32 %s141, 2
      %s144 = smul.addr %s143, 8
      %s145 = scalar_lea.vmem %s4, %s144
      %v146 = vld [vmem:[%s145] sm:$0xff]
      %v147 = vld [vmem:[%s145 + $0x8] sm:$0xff]
      %vm148 = vcmask 523264
      %v150 = vsel %vm148, %v140, 0
      %152 = vmatprep.subr.mxu0 %v40
      %153 = vmatpush1.msra.mxu0 %v39
      %154 = vmatprep.subr.mxu0 %v42
      %155 = vmatpush1.msra.mxu0 %v41
      %156 = vmatprep.subr.mxu0 %v44
      %157 = vmatpush1.msra.mxu0 %v43
      %158 = vmatprep.subr.mxu0 %v46
      %159 = vmatpush1.msra.mxu0 %v45
      %160 = vmatprep.subr.mxu0 %v48
      %161 = vmatpush1.msra.mxu0 %v47
      %162 = vmatprep.subr.mxu0 %v50
      %163 = vmatpush1.msra.mxu0 %v49
      %164 = vmatprep.subr.mxu0 %v52
      %165 = vmatpush1.msra.mxu0 %v51
      %166 = vmatprep.subr.mxu0 %v54
      %167 = vmatpush1.msra.mxu0 %v53
      %168 = vmatprep.subr.mxu0 0.0
      %169 = vmatpush1.msra.mxu0 0.0
      %170 = vmatprep.subr.mxu0 0.0
      %171 = vmatpush1.msra.mxu0 0.0
      %172 = vmatprep.subr.mxu0 0.0
      %173 = vmatpush1.msra.mxu0 0.0
      %174 = vmatprep.subr.mxu0 0.0
      %175 = vmatpush1.msra.mxu0 0.0
      %176 = vmatprep.subr.mxu0 0.0
      %177 = vmatpush1.msra.mxu0 0.0
      %178 = vmatprep.subr.mxu0 0.0
      %179 = vmatpush1.msra.mxu0 0.0
      %180 = vmatprep.subr.mxu0 0.0
      %181 = vmatpush1.msra.mxu0 0.0
      %182 = vmatprep.subr.mxu0 0.0
      %183 = vmatpush1.msra.mxu0 0.0
      %184 = vmatprep.subr.mxu0 0.0
      %185 = vmatpush1.msra.mxu0 0.0
      %186 = vmatprep.subr.mxu0 0.0
      %187 = vmatpush1.msra.mxu0 0.0
      %188 = vmatprep.subr.mxu0 0.0
      %189 = vmatpush1.msra.mxu0 0.0
      %190 = vmatprep.subr.mxu0 0.0
      %191 = vmatpush1.msra.mxu0 0.0
      %192 = vmatprep.subr.mxu0 0.0
      %193 = vmatpush1.msra.mxu0 0.0
      %194 = vmatprep.subr.mxu0 0.0
      %195 = vmatpush1.msra.mxu0 0.0
      %196 = vmatprep.subr.mxu0 0.0
      %197 = vmatpush1.msra.mxu0 0.0
      %198 = vmatprep.subr.mxu0 0.0
      %199 = vmatpush1.msra.mxu0 0.0
      %200 = vmatprep.subr.mxu0 0.0
      %201 = vmatpush1.msra.mxu0 0.0
      %202 = vmatprep.subr.mxu0 0.0
      %203 = vmatpush1.msra.mxu0 0.0
      %204 = vmatprep.subr.mxu0 0.0
      %205 = vmatpush1.msra.mxu0 0.0
      %206 = vmatprep.subr.mxu0 0.0
      %207 = vmatpush1.msra.mxu0 0.0
      %208 = vmatprep.subr.mxu0 0.0
      %209 = vmatpush1.msra.mxu0 0.0
      %210 = vmatprep.subr.mxu0 0.0
      %211 = vmatpush1.msra.mxu0 0.0
      %212 = vmatprep.subr.mxu0 0.0
      %213 = vmatpush1.msra.mxu0 0.0
      %214 = vmatprep.subr.mxu0 0.0
      %215 = vmatpush1.msra.mxu0 0.0
      %216 = vmatprep.mubr.f32.mxu0 0.0
      %217 = vmatmul.mubr.f32.gmra.mrb[0].mxu0 %v150
      %v218 = vpop.f32.mrb[0].mxu0
      %v219 = vadd.f32 0.0, %v218
      %v220 = vpop.f32.mrb[0].mxu0
      %v221 = vadd.f32 0.0, %v220
      %222 = vdwg.mxu0
      %v223 = vadd.f32 %v146, %v219
      %v224 = vadd.f32 %v147, %v221
      %v225 = vxor.u32 %v223, 2147483648
      %v226 = vxor.u32 %v224, 2147483648
      %v227 = vmul.f32 %v225, 1.442695
      %v228 = vpow.pop %v227
      %v229 = vmul.f32 %v226, 1.442695
      %v230 = vpow.pop %v229
      %v231 = vadd.f32 %v228, 1.0
      %v232 = vadd.f32 %v230, 1.0
      %v233 = vrcp.pop %v231
      %v234 = vmul.f32 1.0, %v233
      %v235 = vrcp.pop %v232
      %v236 = vmul.f32 1.0, %v235
      %v237 = vmul.f32 %v236, 2.0
      %v238 = vsub.f32 %v237, 1.0
      %v239 = vmul.f32 %v234, %v238
      %240 = vrot.lane.b32.xlu0 %v133, 64
      %v241 = vpop.permute.xlu0 %240
      %v243 = vmul.f32 %v234, %v241
      %245 = vrot.lane.b32.xlu0 %v243, 64
      %v246 = vpop.permute.xlu0 %245
      %v248 = vadd.f32 %v239, %v246
      %250 = vrot.lane.b32.xlu0 %v134, 96
      %v251 = vpop.permute.xlu0 %250
      %v253 = vmul.f32 %v234, %v251
      %255 = vrot.lane.b32.xlu0 %v253, 32
      %v256 = vpop.permute.xlu0 %255
      %v258 = vadd.f32 %v248, %v256
      %v259 = vtanh.pop %v258
      %261 = vrot.lane.b32.xlu0 %v259, 32
      %v262 = vpop.permute.xlu0 %261
      %v264 = vmul.f32 %v234, %v262
      %v265 = vsel %vm139, %v258, %v264
      %s266 = scalar_lea.vmem [#allocation2], %s61
      %267 = vst.msk [vmem:[%s266] sm:$0xff] %vm148, %v265
    $region14: #{root_centric_tree_lstm.1} parent=1 // loop_footer
      %s60 = sadd.s32 1, %s56
    $region15: #{root_centric_tree_lstm.1} parent=1 // loop_footer_branch
      %55 = sbr.rel target = $region11
    $region16: #{root_centric_tree_lstm.1} parent=1 // loop_exit
      _
    %s268 = sld [smem:[#allocation8]]
    %s269 = scalar_lea.vmem [#allocation2], %s268
    %v270 = vld [vmem:[%s269] sm:$0x1]
    %272 = vrot.lane.b32.xlu0 %v270, 96
    %v273 = vpop.permute.xlu0 %272
    %vm275 = vcmask 253952
    %276 = vst.msk [vmem:[#allocation10] sm:$0x1] %vm275, %v273
    %s277 = sld [smem:[#allocation8 + $0x1]]
    %s278 = scalar_lea.vmem [#allocation2], %s277
    %v279 = vld [vmem:[%s278] sm:$0x1]
    %281 = vrot.lane.b32.xlu0 %v279, 96
    %v282 = vpop.permute.xlu0 %281
    %284 = vst.msk [vmem:[#allocation10 + $0x1] sm:$0x1] %vm275, %v282
    %s285 = sld [smem:[#allocation8 + $0x2]]
    %s286 = scalar_lea.vmem [#allocation2], %s285
    %v287 = vld [vmem:[%s286] sm:$0x1]
    %289 = vrot.lane.b32.xlu0 %v287, 96
    %v290 = vpop.permute.xlu0 %289
    %292 = vst.msk [vmem:[#allocation10 + $0x2] sm:$0x1] %vm275, %v290
    %s293 = sld [smem:[#allocation8 + $0x3]]
    %s294 = scalar_lea.vmem [#allocation2], %s293
    %v295 = vld [vmem:[%s294] sm:$0x1]
    %297 = vrot.lane.b32.xlu0 %v295, 96
    %v298 = vpop.permute.xlu0 %297
    %300 = vst.msk [vmem:[#allocation10 + $0x3] sm:$0x1] %vm275, %v298
    %s301 = sld [smem:[#allocation8 + $0x4]]
    %s302 = scalar_lea.vmem [#allocation2], %s301
    %v303 = vld [vmem:[%s302] sm:$0x1]
    %305 = vrot.lane.b32.xlu0 %v303, 96
    %v306 = vpop.permute.xlu0 %305
    %308 = vst.msk [vmem:[#allocation10 + $0x4] sm:$0x1] %vm275, %v306
    %s309 = sld [smem:[#allocation8 + $0x5]]
    %s310 = scalar_lea.vmem [#allocation2], %s309
    %v311 = vld [vmem:[%s310] sm:$0x1]
    %313 = vrot.lane.b32.xlu0 %v311, 96
    %v314 = vpop.permute.xlu0 %313
    %316 = vst.msk [vmem:[#allocation10 + $0x5] sm:$0x1] %vm275, %v314
    %s317 = sld [smem:[#allocation8 + $0x6]]
    %s318 = scalar_lea.vmem [#allocation2], %s317
    %v319 = vld [vmem:[%s318] sm:$0x1]
    %321 = vrot.lane.b32.xlu0 %v319, 96
    %v322 = vpop.permute.xlu0 %321
    %324 = vst.msk [vmem:[#allocation10 + $0x6] sm:$0x1] %vm275, %v322
    %s325 = sld [smem:[#allocation8 + $0x7]]
    %s326 = scalar_lea.vmem [#allocation2], %s325
    %v327 = vld [vmem:[%s326] sm:$0x1]
    %329 = vrot.lane.b32.xlu0 %v327, 96
    %v330 = vpop.permute.xlu0 %329
    %332 = vst.msk [vmem:[#allocation10 + $0x7] sm:$0x1] %vm275, %v330
    %s333 = sld [smem:[#allocation8 + $0x8]]
    %s334 = scalar_lea.vmem [#allocation2], %s333
    %v335 = vld [vmem:[%s334] sm:$0x1]
    %337 = vrot.lane.b32.xlu0 %v335, 96
    %v338 = vpop.permute.xlu0 %337
    %340 = vst.msk [vmem:[#allocation10 + $0x8] sm:$0x1] %vm275, %v338
    %s341 = sld [smem:[#allocation8 + $0x9]]
    %s342 = scalar_lea.vmem [#allocation2], %s341
    %v343 = vld [vmem:[%s342] sm:$0x1]
    %345 = vrot.lane.b32.xlu0 %v343, 96
    %v346 = vpop.permute.xlu0 %345
    %348 = vst.msk [vmem:[#allocation10 + $0x9] sm:$0x1] %vm275, %v346
    %s349 = sld [smem:[#allocation8 + $0xa]]
    %s350 = scalar_lea.vmem [#allocation2], %s349
    %v351 = vld [vmem:[%s350] sm:$0x1]
    %353 = vrot.lane.b32.xlu0 %v351, 96
    %v354 = vpop.permute.xlu0 %353
    %356 = vst.msk [vmem:[#allocation10 + $0xa] sm:$0x1] %vm275, %v354
    %s357 = sld [smem:[#allocation8 + $0xb]]
    %s358 = scalar_lea.vmem [#allocation2], %s357
    %v359 = vld [vmem:[%s358] sm:$0x1]
    %361 = vrot.lane.b32.xlu0 %v359, 96
    %v362 = vpop.permute.xlu0 %361
    %364 = vst.msk [vmem:[#allocation10 + $0xb] sm:$0x1] %vm275, %v362
    %s365 = sld [smem:[#allocation9]]
    %s366 = scalar_lea.vmem [#allocation2], %s365
    %v367 = vld [vmem:[%s366] sm:$0x1]
    %369 = vrot.lane.b32.xlu0 %v367, 96
    %v370 = vpop.permute.xlu0 %369
    %372 = vst.msk [vmem:[#allocation12] sm:$0x1] %vm275, %v370
    %s373 = sld [smem:[#allocation9 + $0x1]]
    %s374 = scalar_lea.vmem [#allocation2], %s373
    %v375 = vld [vmem:[%s374] sm:$0x1]
    %377 = vrot.lane.b32.xlu0 %v375, 96
    %v378 = vpop.permute.xlu0 %377
    %380 = vst.msk [vmem:[#allocation12 + $0x1] sm:$0x1] %vm275, %v378
    // Predicated region
    $region17: #{root_centric_tree_lstm.1} parent=1 // pred_check
      _
    $region18: #{root_centric_tree_lstm.1} parent=1 // pred_check_branch
      %382 = sbr.rel (0) target = $region20
    $region19: #{root_centric_tree_lstm.1} parent=1 // pred_region
      %s384 = ssub.s32 256, 256
      %385 = vsyncadd [#allocation11], %s384
      %s386 = sshll.u32 [#allocation10], 4
      %s387 = int_to_ptr.vmem [resolvable:$true] %s386
      %392 = dma.vmem_to_hbm [thread:$0]  %s387, 256, %s6, [#allocation11], 128, 128, 8
    $region20: #{root_centric_tree_lstm.1} parent=1 // pred_fallthru
      _
    // Predicated region
    $region21: #{root_centric_tree_lstm.1} parent=1 // pred_check
      _
    $region22: #{root_centric_tree_lstm.1} parent=1 // pred_check_branch
      %394 = sbr.rel (0) target = $region24
    $region23: #{root_centric_tree_lstm.1} parent=1 // pred_region
      %s396 = ssub.s32 32, 32
      %397 = vsyncadd [#allocation13], %s396
      %s399 = sshll.u32 [#allocation12], 4
      %s400 = int_to_ptr.vmem [resolvable:$true] %s399
      %402 = dma.vmem_to_hbm [thread:$0]  %s400, 32, %s7, [#allocation13]
    $region24: #{root_centric_tree_lstm.1} parent=1 // pred_fallthru
      _
    // Predicated region
    $region25: #{root_centric_tree_lstm.1} parent=1 // pred_check
      _
    $region26: #{root_centric_tree_lstm.1} parent=1 // pred_check_branch
      %404 = sbr.rel (0) target = $region28
    $region27: #{root_centric_tree_lstm.1} parent=1 // pred_region
      %405 = dma.done [#allocation11], 256
    $region28: #{root_centric_tree_lstm.1} parent=1 // pred_fallthru
      _
    // Predicated region
    $region29: #{root_centric_tree_lstm.1} parent=1 // pred_check
      _
    $region30: #{root_centric_tree_lstm.1} parent=1 // pred_check_branch
      %407 = sbr.rel (0) target = $region32
    $region31: #{root_centric_tree_lstm.1} parent=1 // pred_region
      %408 = dma.done [#allocation13], 32
    $region32: #{root_centric_tree_lstm.1} parent=1 // pred_fallthru
      _
    %409 = vsyncpa [#allocation11], 1
    %410 = vsyncpa [#allocation13], 1

</llo_original>
